<compile_context>
chip_gen: v6e
topology: v6e:2x2x1
jax: 0.10.0
libtpu: 0.0.40
codegen_flags: <defaults>
</compile_context>

<pallas_src>
import jax
import jax.numpy as jnp
from jax.experimental import pallas as pl
from jax.experimental.pallas import tpu as pltpu

LAYER_SIZES = [2, 64, 64, 64, 1]
HIDDEN = 64
MAX_TILE = 8192       # lanes (batch elements) per grid step
MIN_SPLIT = 2048      # below this many padded lanes, use a single grid step


def _round_up(v, m):
    return ((v + m - 1) // m) * m


def _mlp_kernel(xy_ref, consts_ref, w23_ref, o_ref):
    # xy_ref     : [2, T]     x on sublane 0, y on sublane 1 (batch on lanes)
    # consts_ref : [64, 8]    columns: w1x, w1y, b1, b2, b3, w4, b4(bcast), pad
    # w23_ref    : [128, 64]  rows 0..63 = W2.T, rows 64..127 = W3.T
    # o_ref      : [1, T]     lane-dense output row
    x_row = xy_ref[0:1, :]                  # [1, T]
    y_row = xy_ref[1:2, :]                  # [1, T]

    w1x = consts_ref[:, 0:1]                # [64, 1]
    w1y = consts_ref[:, 1:2]
    b1 = consts_ref[:, 2:3]
    b2 = consts_ref[:, 3:4]
    b3 = consts_ref[:, 4:5]
    w4 = consts_ref[:, 5:6]
    b4 = consts_ref[0:1, 6:7]               # [1, 1] scalar (broadcasts over lanes)

    # Layer 1 (in=2): outer-product broadcast instead of a K=2 MXU pass.
    h = jnp.tanh(w1x * x_row + w1y * y_row + b1)                         # [64, T]

    # Layers 2 & 3: 64x64 MXU matmuls in hidden-major layout, f32 accumulation.
    h = jnp.tanh(
        jnp.dot(w23_ref[0:64, :], h, preferred_element_type=jnp.float32) + b2)
    h = jnp.tanh(
        jnp.dot(w23_ref[64:128, :], h, preferred_element_type=jnp.float32) + b3)

    # Layer 4 (out=1): weighted sublane reduction; result is already a
    # lane-dense [1, T] row.  (Could be moved to the idle MXU as a
    # [1,64]@[64,T] dot only if a bundle dump shows the XLU reduce binding.)
    out = jnp.sum(w4 * h, axis=0, keepdims=True) + b4                    # [1, T]
    o_ref[...] = out.astype(o_ref.dtype)


def _prepare_kernel_params(params):
    """Re-layout logical [in, out] params into the kernel's packed layout."""
    w1, b1 = params["W1"], params["b1"]   # [2, H], [1, H]
    w2, b2 = params["W2"], params["b2"]   # [H, H], [1, H]
    w3, b3 = params["W3"], params["b3"]   # [H, H], [1, H]
    w4, b4 = params["W4"], params["b4"]   # [H, 1], [1, 1]
    h = w2.shape[0]
    consts = jnp.stack(
        [
            w1[0, :],                                    # w1x
            w1[1, :],                                    # w1y
            b1.reshape(-1),                              # b1
            b2.reshape(-1),                              # b2
            b3.reshape(-1),                              # b3
            w4.reshape(-1),                              # w4
            jnp.full((h,), b4.reshape(()), jnp.float32),  # b4 (broadcast column)
            jnp.zeros((h,), jnp.float32),                # pad
        ],
        axis=1,
    ).astype(jnp.float32)                                # [64, 8]
    w23 = jnp.concatenate([w2.T, w3.T], axis=0).astype(jnp.float32)  # [128, 64]
    return consts, w23


def _tile_and_pad(n):
    """Lane-dense batch tiling (multiples of 128).

    Small batches: one grid step (no forced split -> no redundant ~0.35us step
    overhead on single-TC v5e/v6e).  Large batches: >=2 steps with >=1024 lanes
    each so v7x's second TensorCore gets meaningful work, capped at MAX_TILE.
    """
    n_pad = max(128, _round_up(n, 128))
    if n_pad < MIN_SPLIT:
        tile = n_pad
    else:
        tile = min(MAX_TILE, _round_up((n_pad + 1) // 2, 128))
        n_pad = _round_up(n_pad, tile)
    return tile, n_pad


@jax.jit
def mlp_forward(x, y, params):
    """x, y: [N, 1] float32.  params: dict of W1..W4 ([in,out]) and b1..b4 ([1,out])."""
    n = x.shape[0]
    consts, w23 = _prepare_kernel_params(params)
    tile, n_pad = _tile_and_pad(n)
    grid = (n_pad // tile,)

    def as_row(v):
        v = jnp.reshape(v, (-1,)).astype(jnp.float32)
        return jnp.pad(v, (0, n_pad - n))

    xy = jnp.stack([as_row(x), as_row(y)], axis=0)   # [2, n_pad]

    xy_spec = pl.BlockSpec((2, tile), lambda i: (0, i))
    out_spec = pl.BlockSpec((1, tile), lambda i: (0, i))
    # Full-array constant blocks: same block index every grid step -> DMA'd once.
    # (pipeline_mode=pl.Buffered(1) could drop the second buffer; left at the
    #  default to keep lowering maximally portable — the buffers are tiny.)
    consts_spec = pl.BlockSpec(consts.shape, lambda i: (0, 0))
    w23_spec = pl.BlockSpec(w23.shape, lambda i: (0, 0))

    out_row = pl.pallas_call(
        _mlp_kernel,
        out_shape=jax.ShapeDtypeStruct((1, n_pad), jnp.float32),
        grid_spec=pltpu.PrefetchScalarGridSpec(
            num_scalar_prefetch=0,
            grid=grid,
            in_specs=[xy_spec, consts_spec, w23_spec],
            out_specs=out_spec,
        ),
        compiler_params=pltpu.CompilerParams(
            dimension_semantics=("parallel",)),
    )(xy, consts, w23)

    return out_row[0, :n].reshape(n, 1)


def init_params(key, layer_sizes=LAYER_SIZES):
    """Deterministic init mimicking kaiming_uniform_(nonlinearity='tanh'), bias=0."""
    params = {}
    gain = 5.0 / 3.0  # torch gain for tanh
    for i in range(len(layer_sizes) - 1):
        fan_in, fan_out = layer_sizes[i], layer_sizes[i + 1]
        bound = gain * (3.0 / fan_in) ** 0.5
        key, sub = jax.random.split(key)
        # stored as [in, out] (transpose of torch's [out, in])
        w = jax.random.uniform(sub, (fan_in, fan_out), jnp.float32,
                               minval=-bound, maxval=bound)
        b = jnp.zeros((1, fan_out), jnp.float32)
        params[f"W{i + 1}"] = w
        params[f"b{i + 1}"] = b
    return params


def mlp_reference(x, y, params):
    """Pure-JAX reference for correctness check."""
    h = jnp.concatenate([x, y], axis=1)
    h = jnp.tanh(h @ params["W1"] + params["b1"])
    h = jnp.tanh(h @ params["W2"] + params["b2"])
    h = jnp.tanh(h @ params["W3"] + params["b3"])
    return h @ params["W4"] + params["b4"]


if __name__ == "__main__":
    key = jax.random.PRNGKey(0)
    pkey, ykey = jax.random.split(key)

    params = init_params(pkey)

    # Shapes implied by the original script: x = linspace(0, R, 256).view(-1, 1)
    N = 256
    R = 40.0
    x = jnp.linspace(0.0, R, N, dtype=jnp.float32).reshape(-1, 1)
    y = jax.random.normal(ykey, (N, 1), jnp.float32)

    out = jax.block_until_ready(mlp_forward(x, y, params))
    ref = mlp_reference(x, y, params)
    assert out.shape == (N, 1)
    assert jnp.allclose(out, ref, atol=1e-5, rtol=1e-5), "mismatch vs reference"

    # Ragged-batch (padding) path.
    N2 = 200
    out2 = jax.block_until_ready(mlp_forward(x[:N2], y[:N2], params))
    ref2 = mlp_reference(x[:N2], y[:N2], params)
    assert out2.shape == (N2, 1)
    assert jnp.allclose(out2, ref2, atol=1e-5, rtol=1e-5), "ragged mismatch"

    # Multi-step grid path (large batch -> >=2 parallel grid steps).
    N3 = 3000
    k3 = jax.random.PRNGKey(1)
    x3 = jax.random.normal(k3, (N3, 1), jnp.float32)
    y3 = jax.random.normal(jax.random.fold_in(k3, 1), (N3, 1), jnp.float32)
    out3 = jax.block_until_ready(mlp_forward(x3, y3, params))
    ref3 = mlp_reference(x3, y3, params)
    assert out3.shape == (N3, 1)
    assert jnp.allclose(out3, ref3, atol=1e-5, rtol=1e-5), "large-batch mismatch"

    print("KERNEL_OK")
</pallas_src>

<mosaic_0001>
module attributes {stable_mosaic.version = 11 : i64} {
  func.func @_mlp_kernel(%arg0: i32, %arg1: memref<2x256xf32, #tpu.memory_space<vmem>>, %arg2: memref<64x8xf32, #tpu.memory_space<vmem>>, %arg3: memref<128x64xf32, #tpu.memory_space<vmem>>, %arg4: memref<1x256xf32, #tpu.memory_space<vmem>>) attributes {dimension_semantics = [#tpu.dimension_semantics<parallel>], iteration_bounds = array<i64: 1>, scalar_prefetch = 0 : i64, scratch_operands = 0 : i64, tpu.core_type = #tpu.core_type<tc>, window_params = [{transform_indices = @transform_0, window_bounds = array<i64: 2, 256>}, {pipeline_mode = #tpu.pipeline_mode<synchronous>, transform_indices = @transform_1, window_bounds = array<i64: 64, 8>}, {pipeline_mode = #tpu.pipeline_mode<synchronous>, transform_indices = @transform_2, window_bounds = array<i64: 128, 64>}, {transform_indices = @transform_3, window_bounds = array<i64: 1, 256>}]} {
    %c0 = arith.constant 0 : index
    %c0_0 = arith.constant 0 : index
    %0 = vector.load %arg1[%c0, %c0_0] : memref<2x256xf32, #tpu.memory_space<vmem>>, vector<1x256xf32>
    %c1 = arith.constant 1 : index
    %c0_1 = arith.constant 0 : index
    %1 = vector.load %arg1[%c1, %c0_1] : memref<2x256xf32, #tpu.memory_space<vmem>>, vector<1x256xf32>
    %c0_2 = arith.constant 0 : index
    %c0_3 = arith.constant 0 : index
    %2 = vector.load %arg2[%c0_2, %c0_3] : memref<64x8xf32, #tpu.memory_space<vmem>>, vector<64x1xf32>
    %c0_4 = arith.constant 0 : index
    %c1_5 = arith.constant 1 : index
    %3 = vector.load %arg2[%c0_4, %c1_5] : memref<64x8xf32, #tpu.memory_space<vmem>>, vector<64x1xf32>
    %c0_6 = arith.constant 0 : index
    %c2 = arith.constant 2 : index
    %4 = vector.load %arg2[%c0_6, %c2] : memref<64x8xf32, #tpu.memory_space<vmem>>, vector<64x1xf32>
    %c0_7 = arith.constant 0 : index
    %c3 = arith.constant 3 : index
    %5 = vector.load %arg2[%c0_7, %c3] : memref<64x8xf32, #tpu.memory_space<vmem>>, vector<64x1xf32>
    %c0_8 = arith.constant 0 : index
    %c4 = arith.constant 4 : index
    %6 = vector.load %arg2[%c0_8, %c4] : memref<64x8xf32, #tpu.memory_space<vmem>>, vector<64x1xf32>
    %c0_9 = arith.constant 0 : index
    %c5 = arith.constant 5 : index
    %7 = vector.load %arg2[%c0_9, %c5] : memref<64x8xf32, #tpu.memory_space<vmem>>, vector<64x1xf32>
    %c0_10 = arith.constant 0 : index
    %c6 = arith.constant 6 : index
    %8 = vector.load %arg2[%c0_10, %c6] : memref<64x8xf32, #tpu.memory_space<vmem>>, vector<1x1xf32>
    %9 = vector.broadcast %2 : vector<64x1xf32> to vector<64x256xf32>
    %10 = vector.broadcast %0 : vector<1x256xf32> to vector<64x256xf32>
    %11 = arith.mulf %9, %10 : vector<64x256xf32>
    %12 = vector.broadcast %3 : vector<64x1xf32> to vector<64x256xf32>
    %13 = vector.broadcast %1 : vector<1x256xf32> to vector<64x256xf32>
    %14 = arith.mulf %12, %13 : vector<64x256xf32>
    %15 = arith.addf %11, %14 : vector<64x256xf32>
    %16 = vector.broadcast %4 : vector<64x1xf32> to vector<64x256xf32>
    %17 = arith.addf %15, %16 : vector<64x256xf32>
    %18 = math.tanh %17 : vector<64x256xf32>
    %c0_11 = arith.constant 0 : index
    %c0_12 = arith.constant 0 : index
    %19 = vector.load %arg3[%c0_11, %c0_12] : memref<128x64xf32, #tpu.memory_space<vmem>>, vector<64x64xf32>
    %cst = arith.constant dense<0.000000e+00> : vector<64x256xf32>
    %20 = tpu.matmul %19, %18, %cst {dimension_numbers = #tpu.dot_dimension_numbers<[1], [0], [0], [1], [0, 0, 1, 1], [], []>} : vector<64x64xf32>, vector<64x256xf32>, vector<64x256xf32> -> vector<64x256xf32>
    %21 = vector.broadcast %5 : vector<64x1xf32> to vector<64x256xf32>
    %22 = arith.addf %20, %21 : vector<64x256xf32>
    %23 = math.tanh %22 : vector<64x256xf32>
    %c64 = arith.constant 64 : index
    %c0_13 = arith.constant 0 : index
    %24 = vector.load %arg3[%c64, %c0_13] : memref<128x64xf32, #tpu.memory_space<vmem>>, vector<64x64xf32>
    %cst_14 = arith.constant dense<0.000000e+00> : vector<64x256xf32>
    %25 = tpu.matmul %24, %23, %cst_14 {dimension_numbers = #tpu.dot_dimension_numbers<[1], [0], [0], [1], [0, 0, 1, 1], [], []>} : vector<64x64xf32>, vector<64x256xf32>, vector<64x256xf32> -> vector<64x256xf32>
    %26 = vector.broadcast %6 : vector<64x1xf32> to vector<64x256xf32>
    %27 = arith.addf %25, %26 : vector<64x256xf32>
    %28 = math.tanh %27 : vector<64x256xf32>
    %29 = vector.broadcast %7 : vector<64x1xf32> to vector<64x256xf32>
    %30 = arith.mulf %29, %28 : vector<64x256xf32>
    %cst_15 = arith.constant dense<0.000000e+00> : vector<256xf32>
    %31 = vector.multi_reduction <add>, %30, %cst_15 [0] : vector<64x256xf32> to vector<256xf32>
    %32 = vector.shape_cast %31 : vector<256xf32> to vector<1x256xf32>
    %33 = vector.broadcast %8 : vector<1x1xf32> to vector<1x256xf32>
    %34 = arith.addf %32, %33 : vector<1x256xf32>
    %c0_16 = arith.constant 0 : index
    %c0_17 = arith.constant 0 : index
    %35 = vector.load %arg4[%c0_16, %c0_17] : memref<1x256xf32, #tpu.memory_space<vmem>>, vector<1x256xf32>
    tpu.vector_store %arg4[%c0_16, %c0_17], %34 {strides = array<i32>} : memref<1x256xf32, #tpu.memory_space<vmem>>, vector<1x256xf32>,
    return
  }
  func.func @transform_0(%arg0: i32) -> (i32, i32) {
    %c0_i32 = arith.constant 0 : i32
    %c0_i32_0 = arith.constant 0 : i32
    return %c0_i32, %arg0 : i32, i32
  }
  func.func @transform_1(%arg0: i32) -> (i32, i32) {
    %c0_i32 = arith.constant 0 : i32
    %c0_i32_0 = arith.constant 0 : i32
    %c0_i32_1 = arith.constant 0 : i32
    return %c0_i32, %c0_i32_0 : i32, i32
  }
  func.func @transform_2(%arg0: i32) -> (i32, i32) {
    %c0_i32 = arith.constant 0 : i32
    %c0_i32_0 = arith.constant 0 : i32
    %c0_i32_1 = arith.constant 0 : i32
    return %c0_i32, %c0_i32_0 : i32, i32
  }
  func.func @transform_3(%arg0: i32) -> (i32, i32) {
    %c0_i32 = arith.constant 0 : i32
    %c0_i32_0 = arith.constant 0 : i32
    return %c0_i32, %arg0 : i32, i32
  }
}

</mosaic_0001>

<llo_original>
// kernel: mlp_forward.1
$region0: #{mlp_forward.1}
  #allocation0 [shape = 'u32[]', space=smem, size = 0x4, offset = 0x4, fixed_abs, tag = 'smem constant byte address 0x4 - core index']
  #allocation1 [shape = 'u32[144,128]{1,0:T(1,128)}', space=vmem, size = 0x12000, scoped, tag = 'internal scratch']
  %s0 = inlined_call_operand.vmem [shape: f32[2,256], index: 0, kind: input, shape index: {}]
  %s1 = inlined_call_operand.vmem [shape: f32[64,8], index: 1, kind: input, shape index: {}]
  %s2 = inlined_call_operand.vmem [shape: f32[128,64], index: 2, kind: input, shape index: {}]
  %s3 = inlined_call_operand.hbm [shape: f32[1,256], index: 3, kind: output, shape index: {}]
  %s4 = sld [smem:[#allocation0]]
  $region22: #{mlp_forward.1} parent=0
    _
  %s6 = ssub.s32 1, %s4
  %s7 = scalar_select 0, %s6, %s4
  $region1: #{mlp_forward.1} parent=0
    #allocation2 [shape = 'u8[1024]{0}', space=vmem, size = 0x400, scoped, tag = 'output window, operand 0, single buffered']
    #allocation3 [shape = 's32[1]{0}', space=sflag, size = 0x4, scoped, tag = 'scoped memory for mlp_forward.1']
    %8 = vsyncpa [#allocation3], 0
    // Predicated region
    $region2: #{mlp_forward.1} parent=1 // pred_check
      _
    $region3: #{mlp_forward.1} parent=1 // pred_check_branch
      %10 = sbr.rel (0) target = $region5
    $region4: #{mlp_forward.1} parent=1 // pred_region
      _
    $region5: #{mlp_forward.1} parent=1 // pred_fallthru
      _
    // Predicated region
    $region6: #{mlp_forward.1} parent=1 // pred_check
      _
    $region7: #{mlp_forward.1} parent=1 // pred_check_branch
      %12 = sbr.rel (0) target = $region9
    $region8: #{mlp_forward.1} parent=1 // pred_region
      _
    $region9: #{mlp_forward.1} parent=1 // pred_fallthru
      _
    // Predicated region
    $region10: #{mlp_forward.1} parent=1 // pred_check
      _
    $region11: #{mlp_forward.1} parent=1 // pred_check_branch
      %14 = sbr.rel (0) target = $region13
    $region12: #{mlp_forward.1} parent=1 // pred_region
      _
    $region13: #{mlp_forward.1} parent=1 // pred_fallthru
      _
    %v15 = vld [vmem:[%s0] ss:$2 sm:$0x3]
    %s16 = scalar_lea.vmem %s0, 1
    %v17 = vld [vmem:[%s16] ss:$2 sm:$0x3]
    %v18 = vld [vmem:[%s1] sm:$0xff]
    %v19 = vld [vmem:[%s1 + $0x8] sm:$0xff]
    %v20 = vld [vmem:[%s1 + $0x10] sm:$0xff]
    %v21 = vld [vmem:[%s1 + $0x18] sm:$0xff]
    %v22 = vld [vmem:[%s1 + $0x20] sm:$0xff]
    %v23 = vld [vmem:[%s1 + $0x28] sm:$0xff]
    %v24 = vld [vmem:[%s1 + $0x30] sm:$0xff]
    %v25 = vld [vmem:[%s1 + $0x38] sm:$0xff]
    %v26 = vld [vmem:[%s1] sm:$0x1]
    %28 = vset.pattern.permute.xlu0 0
    %29 = vperm.xlu0 %28, %v18
    %v30 = vpop.permute.xlu0 %29
    %33 = vset.pattern.permute.xlu0 0
    %34 = vperm.xlu0 %33, %v19
    %v35 = vpop.permute.xlu0 %34
    %38 = vset.pattern.permute.xlu0 0
    %39 = vperm.xlu0 %38, %v20
    %v40 = vpop.permute.xlu0 %39
    %43 = vset.pattern.permute.xlu0 0
    %44 = vperm.xlu0 %43, %v21
    %v45 = vpop.permute.xlu0 %44
    %48 = vset.pattern.permute.xlu0 0
    %49 = vperm.xlu0 %48, %v22
    %v50 = vpop.permute.xlu0 %49
    %53 = vset.pattern.permute.xlu0 0
    %54 = vperm.xlu0 %53, %v23
    %v55 = vpop.permute.xlu0 %54
    %58 = vset.pattern.permute.xlu0 0
    %59 = vperm.xlu0 %58, %v24
    %v60 = vpop.permute.xlu0 %59
    %63 = vset.pattern.permute.xlu0 0
    %64 = vperm.xlu0 %63, %v25
    %v65 = vpop.permute.xlu0 %64
    %v68 = vlaneseq
    %v69 = vshrl.u32 %v68, 7
    %v70 = vsub.s32 0, %v69
    %v71 = vrot.slane %v15, %v70
    %v72 = vlaneseq
    %v73 = vshrl.u32 %v72, 7
    %v74 = vsub.s32 1, %v73
    %v75 = vrot.slane %v15, %v74
    %v78 = vmul.f32 %v30, %v71
    %v79 = vmul.f32 %v30, %v75
    %v80 = vmul.f32 %v35, %v71
    %v81 = vmul.f32 %v35, %v75
    %v82 = vmul.f32 %v40, %v71
    %v83 = vmul.f32 %v40, %v75
    %v84 = vmul.f32 %v45, %v71
    %v85 = vmul.f32 %v45, %v75
    %v86 = vmul.f32 %v50, %v71
    %v87 = vmul.f32 %v50, %v75
    %v88 = vmul.f32 %v55, %v71
    %v89 = vmul.f32 %v55, %v75
    %v90 = vmul.f32 %v60, %v71
    %v91 = vmul.f32 %v60, %v75
    %v92 = vmul.f32 %v65, %v71
    %v93 = vmul.f32 %v65, %v75
    %94 = vset.pattern.permute.xlu0 1
    %95 = vperm.xlu0 %94, %v18
    %v96 = vpop.permute.xlu0 %95
    %98 = vset.pattern.permute.xlu0 1
    %99 = vperm.xlu0 %98, %v19
    %v100 = vpop.permute.xlu0 %99
    %102 = vset.pattern.permute.xlu0 1
    %103 = vperm.xlu0 %102, %v20
    %v104 = vpop.permute.xlu0 %103
    %106 = vset.pattern.permute.xlu0 1
    %107 = vperm.xlu0 %106, %v21
    %v108 = vpop.permute.xlu0 %107
    %110 = vset.pattern.permute.xlu0 1
    %111 = vperm.xlu0 %110, %v22
    %v112 = vpop.permute.xlu0 %111
    %114 = vset.pattern.permute.xlu0 1
    %115 = vperm.xlu0 %114, %v23
    %v116 = vpop.permute.xlu0 %115
    %118 = vset.pattern.permute.xlu0 1
    %119 = vperm.xlu0 %118, %v24
    %v120 = vpop.permute.xlu0 %119
    %122 = vset.pattern.permute.xlu0 1
    %123 = vperm.xlu0 %122, %v25
    %v124 = vpop.permute.xlu0 %123
    %v127 = vlaneseq
    %v128 = vshrl.u32 %v127, 7
    %v129 = vsub.s32 0, %v128
    %v130 = vrot.slane %v17, %v129
    %v131 = vlaneseq
    %v132 = vshrl.u32 %v131, 7
    %v133 = vsub.s32 1, %v132
    %v134 = vrot.slane %v17, %v133
    %v137 = vmul.f32 %v96, %v130
    %v138 = vmul.f32 %v96, %v134
    %v139 = vmul.f32 %v100, %v130
    %v140 = vmul.f32 %v100, %v134
    %v141 = vmul.f32 %v104, %v130
    %v142 = vmul.f32 %v104, %v134
    %v143 = vmul.f32 %v108, %v130
    %v144 = vmul.f32 %v108, %v134
    %v145 = vmul.f32 %v112, %v130
    %v146 = vmul.f32 %v112, %v134
    %v147 = vmul.f32 %v116, %v130
    %v148 = vmul.f32 %v116, %v134
    %v149 = vmul.f32 %v120, %v130
    %v150 = vmul.f32 %v120, %v134
    %v151 = vmul.f32 %v124, %v130
    %v152 = vmul.f32 %v124, %v134
    %v153 = vadd.f32 %v78, %v137
    %v154 = vadd.f32 %v79, %v138
    %v155 = vadd.f32 %v80, %v139
    %v156 = vadd.f32 %v81, %v140
    %v157 = vadd.f32 %v82, %v141
    %v158 = vadd.f32 %v83, %v142
    %v159 = vadd.f32 %v84, %v143
    %v160 = vadd.f32 %v85, %v144
    %v161 = vadd.f32 %v86, %v145
    %v162 = vadd.f32 %v87, %v146
    %v163 = vadd.f32 %v88, %v147
    %v164 = vadd.f32 %v89, %v148
    %v165 = vadd.f32 %v90, %v149
    %v166 = vadd.f32 %v91, %v150
    %v167 = vadd.f32 %v92, %v151
    %v168 = vadd.f32 %v93, %v152
    %169 = vset.pattern.permute.xlu0 2
    %170 = vperm.xlu0 %169, %v18
    %v171 = vpop.permute.xlu0 %170
    %173 = vset.pattern.permute.xlu0 2
    %174 = vperm.xlu0 %173, %v19
    %v175 = vpop.permute.xlu0 %174
    %177 = vset.pattern.permute.xlu0 2
    %178 = vperm.xlu0 %177, %v20
    %v179 = vpop.permute.xlu0 %178
    %181 = vset.pattern.permute.xlu0 2
    %182 = vperm.xlu0 %181, %v21
    %v183 = vpop.permute.xlu0 %182
    %185 = vset.pattern.permute.xlu0 2
    %186 = vperm.xlu0 %185, %v22
    %v187 = vpop.permute.xlu0 %186
    %189 = vset.pattern.permute.xlu0 2
    %190 = vperm.xlu0 %189, %v23
    %v191 = vpop.permute.xlu0 %190
    %193 = vset.pattern.permute.xlu0 2
    %194 = vperm.xlu0 %193, %v24
    %v195 = vpop.permute.xlu0 %194
    %197 = vset.pattern.permute.xlu0 2
    %198 = vperm.xlu0 %197, %v25
    %v199 = vpop.permute.xlu0 %198
    %v201 = vadd.f32 %v153, %v171
    %v202 = vadd.f32 %v154, %v171
    %v203 = vadd.f32 %v155, %v175
    %v204 = vadd.f32 %v156, %v175
    %v205 = vadd.f32 %v157, %v179
    %v206 = vadd.f32 %v158, %v179
    %v207 = vadd.f32 %v159, %v183
    %v208 = vadd.f32 %v160, %v183
    %v209 = vadd.f32 %v161, %v187
    %v210 = vadd.f32 %v162, %v187
    %v211 = vadd.f32 %v163, %v191
    %v212 = vadd.f32 %v164, %v191
    %v213 = vadd.f32 %v165, %v195
    %v214 = vadd.f32 %v166, %v195
    %v215 = vadd.f32 %v167, %v199
    %v216 = vadd.f32 %v168, %v199
    %v217 = vtanh.pop %v201
    %v218 = vtanh.pop %v202
    %v219 = vtanh.pop %v203
    %v220 = vtanh.pop %v204
    %v221 = vtanh.pop %v205
    %v222 = vtanh.pop %v206
    %v223 = vtanh.pop %v207
    %v224 = vtanh.pop %v208
    %v225 = vtanh.pop %v209
    %v226 = vtanh.pop %v210
    %v227 = vtanh.pop %v211
    %v228 = vtanh.pop %v212
    %v229 = vtanh.pop %v213
    %v230 = vtanh.pop %v214
    %v231 = vtanh.pop %v215
    %v232 = vtanh.pop %v216
    %v233 = vld [vmem:[%s2] sm:$0xff]
    %v234 = vld [vmem:[%s2 + $0x8] sm:$0xff]
    %v235 = vld [vmem:[%s2 + $0x10] sm:$0xff]
    %v236 = vld [vmem:[%s2 + $0x18] sm:$0xff]
    %v237 = vld [vmem:[%s2 + $0x20] sm:$0xff]
    %v238 = vld [vmem:[%s2 + $0x28] sm:$0xff]
    %v239 = vld [vmem:[%s2 + $0x30] sm:$0xff]
    %v240 = vld [vmem:[%s2 + $0x38] sm:$0xff]
    %241 = vset.pattern.permute.xlu0 3
    %242 = vperm.xlu0 %241, %v18
    %v243 = vpop.permute.xlu0 %242
    %245 = vset.pattern.permute.xlu0 3
    %246 = vperm.xlu0 %245, %v19
    %v247 = vpop.permute.xlu0 %246
    %249 = vset.pattern.permute.xlu0 3
    %250 = vperm.xlu0 %249, %v20
    %v251 = vpop.permute.xlu0 %250
    %253 = vset.pattern.permute.xlu0 3
    %254 = vperm.xlu0 %253, %v21
    %v255 = vpop.permute.xlu0 %254
    %257 = vset.pattern.permute.xlu0 3
    %258 = vperm.xlu0 %257, %v22
    %v259 = vpop.permute.xlu0 %258
    %261 = vset.pattern.permute.xlu0 3
    %262 = vperm.xlu0 %261, %v23
    %v263 = vpop.permute.xlu0 %262
    %265 = vset.pattern.permute.xlu0 3
    %266 = vperm.xlu0 %265, %v24
    %v267 = vpop.permute.xlu0 %266
    %269 = vset.pattern.permute.xlu0 3
    %270 = vperm.xlu0 %269, %v25
    %v271 = vpop.permute.xlu0 %270
    %vm273 = vcmask 523264
    %v275 = vsel %vm273, %v233, 0
    %v278 = vsel %vm273, %v234, 0
    %v281 = vsel %vm273, %v235, 0
    %v284 = vsel %vm273, %v236, 0
    %v287 = vsel %vm273, %v237, 0
    %v290 = vsel %vm273, %v238, 0
    %v293 = vsel %vm273, %v239, 0
    %v296 = vsel %vm273, %v240, 0
    %298 = vmatprep.subr.mxu0 0.0
    %299 = vmatpush1.msra.mxu0 0.0
    %300 = vmatprep.subr.mxu0 0.0
    %301 = vmatpush1.msra.mxu0 0.0
    %302 = vmatprep.subr.mxu0 0.0
    %303 = vmatpush1.msra.mxu0 0.0
    %304 = vmatprep.subr.mxu0 0.0
    %305 = vmatpush1.msra.mxu0 0.0
    %306 = vmatprep.subr.mxu0 0.0
    %307 = vmatpush1.msra.mxu0 0.0
    %308 = vmatprep.subr.mxu0 0.0
    %309 = vmatpush1.msra.mxu0 0.0
    %310 = vmatprep.subr.mxu0 0.0
    %311 = vmatpush1.msra.mxu0 0.0
    %312 = vmatprep.subr.mxu0 0.0
    %313 = vmatpush1.msra.mxu0 0.0
    %314 = vmatprep.subr.mxu0 %v232
    %315 = vmatpush1.msra.mxu0 %v231
    %316 = vmatprep.subr.mxu0 %v230
    %317 = vmatpush1.msra.mxu0 %v229
    %318 = vmatprep.subr.mxu0 %v228
    %319 = vmatpush1.msra.mxu0 %v227
    %320 = vmatprep.subr.mxu0 %v226
    %321 = vmatpush1.msra.mxu0 %v225
    %322 = vmatprep.subr.mxu0 %v224
    %323 = vmatpush1.msra.mxu0 %v223
    %324 = vmatprep.subr.mxu0 %v222
    %325 = vmatpush1.msra.mxu0 %v221
    %326 = vmatprep.subr.mxu0 %v220
    %327 = vmatpush1.msra.mxu0 %v219
    %328 = vmatprep.subr.mxu0 %v218
    %329 = vmatpush1.msra.mxu0 %v217
    %330 = vmatprep.subr.mxu0 0.0
    %331 = vmatpush2.msra.mxu0 0.0
    %332 = vmatprep.subr.mxu0 0.0
    %333 = vmatpush2.msra.mxu0 0.0
    %334 = vmatprep.subr.mxu0 0.0
    %335 = vmatpush2.msra.mxu0 0.0
    %336 = vmatprep.subr.mxu0 0.0
    %337 = vmatpush2.msra.mxu0 0.0
    %338 = vmatprep.subr.mxu0 0.0
    %339 = vmatpush2.msra.mxu0 0.0
    %340 = vmatprep.subr.mxu0 0.0
    %341 = vmatpush2.msra.mxu0 0.0
    %342 = vmatprep.subr.mxu0 0.0
    %343 = vmatpush2.msra.mxu0 0.0
    %344 = vmatprep.subr.mxu0 0.0
    %345 = vmatpush2.msra.mxu0 0.0
    %346 = vmatprep.subr.mxu0 0.0
    %347 = vmatpush2.msra.mxu0 0.0
    %348 = vmatprep.subr.mxu0 0.0
    %349 = vmatpush2.msra.mxu0 0.0
    %350 = vmatprep.subr.mxu0 0.0
    %351 = vmatpush2.msra.mxu0 0.0
    %352 = vmatprep.subr.mxu0 0.0
    %353 = vmatpush2.msra.mxu0 0.0
    %354 = vmatprep.subr.mxu0 0.0
    %355 = vmatpush2.msra.mxu0 0.0
    %356 = vmatprep.subr.mxu0 0.0
    %357 = vmatpush2.msra.mxu0 0.0
    %358 = vmatprep.subr.mxu0 0.0
    %359 = vmatpush2.msra.mxu0 0.0
    %360 = vmatprep.subr.mxu0 0.0
    %361 = vmatpush2.msra.mxu0 0.0
    %362 = vmatprep.mubr.f32.mxu0 0.0
    %363 = vmatmul.mubr.f32.gmra.mxu0 %v275
    %v364 = vpop.f32.mrf.mxu0
    %v365 = vadd.f32 %v243, %v364
    %v366 = vpop.f32.mrf.mxu0
    %v367 = vadd.f32 %v243, %v366
    %368 = vmatprep.mubr.f32.mxu0 0.0
    %369 = vmatmul.mubr.f32.gmra.mxu0 %v278
    %v370 = vpop.f32.mrf.mxu0
    %v371 = vadd.f32 %v247, %v370
    %v372 = vpop.f32.mrf.mxu0
    %v373 = vadd.f32 %v247, %v372
    %374 = vmatprep.mubr.f32.mxu0 0.0
    %375 = vmatmul.mubr.f32.gmra.mxu0 %v281
    %v376 = vpop.f32.mrf.mxu0
    %v377 = vadd.f32 %v251, %v376
    %v378 = vpop.f32.mrf.mxu0
    %v379 = vadd.f32 %v251, %v378
    %380 = vmatprep.mubr.f32.mxu0 0.0
    %381 = vmatmul.mubr.f32.gmra.mxu0 %v284
    %v382 = vpop.f32.mrf.mxu0
    %v383 = vadd.f32 %v255, %v382
    %v384 = vpop.f32.mrf.mxu0
    %v385 = vadd.f32 %v255, %v384
    %386 = vmatprep.mubr.f32.mxu0 0.0
    %387 = vmatmul.mubr.f32.gmra.mxu0 %v287
    %v388 = vpop.f32.mrf.mxu0
    %v389 = vadd.f32 %v259, %v388
    %v390 = vpop.f32.mrf.mxu0
    %v391 = vadd.f32 %v259, %v390
    %392 = vmatprep.mubr.f32.mxu0 0.0
    %393 = vmatmul.mubr.f32.gmra.mxu0 %v290
    %v394 = vpop.f32.mrf.mxu0
    %v395 = vadd.f32 %v263, %v394
    %v396 = vpop.f32.mrf.mxu0
    %v397 = vadd.f32 %v263, %v396
    %398 = vmatprep.mubr.f32.mxu0 0.0
    %399 = vmatmul.mubr.f32.gmra.mxu0 %v293
    %v400 = vpop.f32.mrf.mxu0
    %v401 = vadd.f32 %v267, %v400
    %v402 = vpop.f32.mrf.mxu0
    %v403 = vadd.f32 %v267, %v402
    %404 = vmatprep.mubr.f32.mxu0 0.0
    %405 = vmatmul.mubr.f32.gmra.mxu0 %v296
    %v406 = vpop.f32.mrf.mxu0
    %v407 = vadd.f32 %v271, %v406
    %v408 = vpop.f32.mrf.mxu0
    %v409 = vadd.f32 %v271, %v408
    %410 = vdwg.mxu0
    %v411 = vtanh.pop %v365
    %v412 = vtanh.pop %v367
    %v413 = vtanh.pop %v371
    %v414 = vtanh.pop %v373
    %v415 = vtanh.pop %v377
    %v416 = vtanh.pop %v379
    %v417 = vtanh.pop %v383
    %v418 = vtanh.pop %v385
    %v419 = vtanh.pop %v389
    %v420 = vtanh.pop %v391
    %v421 = vtanh.pop %v395
    %v422 = vtanh.pop %v397
    %v423 = vtanh.pop %v401
    %v424 = vtanh.pop %v403
    %v425 = vtanh.pop %v407
    %v426 = vtanh.pop %v409
    %v427 = vld [vmem:[%s2 + $0x40] sm:$0xff]
    %v428 = vld [vmem:[%s2 + $0x48] sm:$0xff]
    %v429 = vld [vmem:[%s2 + $0x50] sm:$0xff]
    %v430 = vld [vmem:[%s2 + $0x58] sm:$0xff]
    %v431 = vld [vmem:[%s2 + $0x60] sm:$0xff]
    %v432 = vld [vmem:[%s2 + $0x68] sm:$0xff]
    %v433 = vld [vmem:[%s2 + $0x70] sm:$0xff]
    %v434 = vld [vmem:[%s2 + $0x78] sm:$0xff]
    %435 = vset.pattern.permute.xlu0 4
    %436 = vperm.xlu0 %435, %v18
    %v437 = vpop.permute.xlu0 %436
    %439 = vset.pattern.permute.xlu0 4
    %440 = vperm.xlu0 %439, %v19
    %v441 = vpop.permute.xlu0 %440
    %443 = vset.pattern.permute.xlu0 4
    %444 = vperm.xlu0 %443, %v20
    %v445 = vpop.permute.xlu0 %444
    %447 = vset.pattern.permute.xlu0 4
    %448 = vperm.xlu0 %447, %v21
    %v449 = vpop.permute.xlu0 %448
    %451 = vset.pattern.permute.xlu0 4
    %452 = vperm.xlu0 %451, %v22
    %v453 = vpop.permute.xlu0 %452
    %455 = vset.pattern.permute.xlu0 4
    %456 = vperm.xlu0 %455, %v23
    %v457 = vpop.permute.xlu0 %456
    %459 = vset.pattern.permute.xlu0 4
    %460 = vperm.xlu0 %459, %v24
    %v461 = vpop.permute.xlu0 %460
    %463 = vset.pattern.permute.xlu0 4
    %464 = vperm.xlu0 %463, %v25
    %v465 = vpop.permute.xlu0 %464
    %v468 = vsel %vm273, %v427, 0
    %v471 = vsel %vm273, %v428, 0
    %v474 = vsel %vm273, %v429, 0
    %v477 = vsel %vm273, %v430, 0
    %v480 = vsel %vm273, %v431, 0
    %v483 = vsel %vm273, %v432, 0
    %v486 = vsel %vm273, %v433, 0
    %v489 = vsel %vm273, %v434, 0
    %491 = vmatprep.subr.mxu0 0.0
    %492 = vmatpush1.msra.mxu0 0.0
    %493 = vmatprep.subr.mxu0 0.0
    %494 = vmatpush1.msra.mxu0 0.0
    %495 = vmatprep.subr.mxu0 0.0
    %496 = vmatpush1.msra.mxu0 0.0
    %497 = vmatprep.subr.mxu0 0.0
    %498 = vmatpush1.msra.mxu0 0.0
    %499 = vmatprep.subr.mxu0 0.0
    %500 = vmatpush1.msra.mxu0 0.0
    %501 = vmatprep.subr.mxu0 0.0
    %502 = vmatpush1.msra.mxu0 0.0
    %503 = vmatprep.subr.mxu0 0.0
    %504 = vmatpush1.msra.mxu0 0.0
    %505 = vmatprep.subr.mxu0 0.0
    %506 = vmatpush1.msra.mxu0 0.0
    %507 = vmatprep.subr.mxu0 %v426
    %508 = vmatpush1.msra.mxu0 %v425
    %509 = vmatprep.subr.mxu0 %v424
    %510 = vmatpush1.msra.mxu0 %v423
    %511 = vmatprep.subr.mxu0 %v422
    %512 = vmatpush1.msra.mxu0 %v421
    %513 = vmatprep.subr.mxu0 %v420
    %514 = vmatpush1.msra.mxu0 %v419
    %515 = vmatprep.subr.mxu0 %v418
    %516 = vmatpush1.msra.mxu0 %v417
    %517 = vmatprep.subr.mxu0 %v416
    %518 = vmatpush1.msra.mxu0 %v415
    %519 = vmatprep.subr.mxu0 %v414
    %520 = vmatpush1.msra.mxu0 %v413
    %521 = vmatprep.subr.mxu0 %v412
    %522 = vmatpush1.msra.mxu0 %v411
    %523 = vmatprep.subr.mxu0 0.0
    %524 = vmatpush2.msra.mxu0 0.0
    %525 = vmatprep.subr.mxu0 0.0
    %526 = vmatpush2.msra.mxu0 0.0
    %527 = vmatprep.subr.mxu0 0.0
    %528 = vmatpush2.msra.mxu0 0.0
    %529 = vmatprep.subr.mxu0 0.0
    %530 = vmatpush2.msra.mxu0 0.0
    %531 = vmatprep.subr.mxu0 0.0
    %532 = vmatpush2.msra.mxu0 0.0
    %533 = vmatprep.subr.mxu0 0.0
    %534 = vmatpush2.msra.mxu0 0.0
    %535 = vmatprep.subr.mxu0 0.0
    %536 = vmatpush2.msra.mxu0 0.0
    %537 = vmatprep.subr.mxu0 0.0
    %538 = vmatpush2.msra.mxu0 0.0
    %539 = vmatprep.subr.mxu0 0.0
    %540 = vmatpush2.msra.mxu0 0.0
    %541 = vmatprep.subr.mxu0 0.0
    %542 = vmatpush2.msra.mxu0 0.0
    %543 = vmatprep.subr.mxu0 0.0
    %544 = vmatpush2.msra.mxu0 0.0
    %545 = vmatprep.subr.mxu0 0.0
    %546 = vmatpush2.msra.mxu0 0.0
    %547 = vmatprep.subr.mxu0 0.0
    %548 = vmatpush2.msra.mxu0 0.0
    %549 = vmatprep.subr.mxu0 0.0
    %550 = vmatpush2.msra.mxu0 0.0
    %551 = vmatprep.subr.mxu0 0.0
    %552 = vmatpush2.msra.mxu0 0.0
    %553 = vmatprep.subr.mxu0 0.0
    %554 = vmatpush2.msra.mxu0 0.0
    %555 = vmatprep.mubr.f32.mxu0 0.0
    %556 = vmatmul.mubr.f32.gmra.mxu0 %v468
    %v557 = vpop.f32.mrf.mxu0
    %v558 = vadd.f32 %v437, %v557
    %v559 = vpop.f32.mrf.mxu0
    %v560 = vadd.f32 %v437, %v559
    %561 = vmatprep.mubr.f32.mxu0 0.0
    %562 = vmatmul.mubr.f32.gmra.mxu0 %v471
    %v563 = vpop.f32.mrf.mxu0
    %v564 = vadd.f32 %v441, %v563
    %v565 = vpop.f32.mrf.mxu0
    %v566 = vadd.f32 %v441, %v565
    %567 = vmatprep.mubr.f32.mxu0 0.0
    %568 = vmatmul.mubr.f32.gmra.mxu0 %v474
    %v569 = vpop.f32.mrf.mxu0
    %v570 = vadd.f32 %v445, %v569
    %v571 = vpop.f32.mrf.mxu0
    %v572 = vadd.f32 %v445, %v571
    %573 = vmatprep.mubr.f32.mxu0 0.0
    %574 = vmatmul.mubr.f32.gmra.mxu0 %v477
    %v575 = vpop.f32.mrf.mxu0
    %v576 = vadd.f32 %v449, %v575
    %v577 = vpop.f32.mrf.mxu0
    %v578 = vadd.f32 %v449, %v577
    %579 = vmatprep.mubr.f32.mxu0 0.0
    %580 = vmatmul.mubr.f32.gmra.mxu0 %v480
    %v581 = vpop.f32.mrf.mxu0
    %v582 = vadd.f32 %v453, %v581
    %v583 = vpop.f32.mrf.mxu0
    %v584 = vadd.f32 %v453, %v583
    %585 = vmatprep.mubr.f32.mxu0 0.0
    %586 = vmatmul.mubr.f32.gmra.mxu0 %v483
    %v587 = vpop.f32.mrf.mxu0
    %v588 = vadd.f32 %v457, %v587
    %v589 = vpop.f32.mrf.mxu0
    %v590 = vadd.f32 %v457, %v589
    %591 = vmatprep.mubr.f32.mxu0 0.0
    %592 = vmatmul.mubr.f32.gmra.mxu0 %v486
    %v593 = vpop.f32.mrf.mxu0
    %v594 = vadd.f32 %v461, %v593
    %v595 = vpop.f32.mrf.mxu0
    %v596 = vadd.f32 %v461, %v595
    %597 = vmatprep.mubr.f32.mxu0 0.0
    %598 = vmatmul.mubr.f32.gmra.mxu0 %v489
    %v599 = vpop.f32.mrf.mxu0
    %v600 = vadd.f32 %v465, %v599
    %v601 = vpop.f32.mrf.mxu0
    %v602 = vadd.f32 %v465, %v601
    %603 = vdwg.mxu0
    %v604 = vtanh.pop %v558
    %v605 = vtanh.pop %v560
    %v606 = vtanh.pop %v564
    %v607 = vtanh.pop %v566
    %v608 = vtanh.pop %v570
    %v609 = vtanh.pop %v572
    %v610 = vtanh.pop %v576
    %v611 = vtanh.pop %v578
    %v612 = vtanh.pop %v582
    %v613 = vtanh.pop %v584
    %v614 = vtanh.pop %v588
    %v615 = vtanh.pop %v590
    %v616 = vtanh.pop %v594
    %v617 = vtanh.pop %v596
    %v618 = vtanh.pop %v600
    %v619 = vtanh.pop %v602
    %620 = vset.pattern.permute.xlu0 5
    %621 = vperm.xlu0 %620, %v18
    %v622 = vpop.permute.xlu0 %621
    %624 = vset.pattern.permute.xlu0 5
    %625 = vperm.xlu0 %624, %v19
    %v626 = vpop.permute.xlu0 %625
    %628 = vset.pattern.permute.xlu0 5
    %629 = vperm.xlu0 %628, %v20
    %v630 = vpop.permute.xlu0 %629
    %632 = vset.pattern.permute.xlu0 5
    %633 = vperm.xlu0 %632, %v21
    %v634 = vpop.permute.xlu0 %633
    %636 = vset.pattern.permute.xlu0 5
    %637 = vperm.xlu0 %636, %v22
    %v638 = vpop.permute.xlu0 %637
    %640 = vset.pattern.permute.xlu0 5
    %641 = vperm.xlu0 %640, %v23
    %v642 = vpop.permute.xlu0 %641
    %644 = vset.pattern.permute.xlu0 5
    %645 = vperm.xlu0 %644, %v24
    %v646 = vpop.permute.xlu0 %645
    %648 = vset.pattern.permute.xlu0 5
    %649 = vperm.xlu0 %648, %v25
    %v650 = vpop.permute.xlu0 %649
    %v652 = vmul.f32 %v622, %v604
    %v653 = vmul.f32 %v622, %v605
    %v654 = vmul.f32 %v626, %v606
    %v655 = vmul.f32 %v626, %v607
    %v656 = vmul.f32 %v630, %v608
    %v657 = vmul.f32 %v630, %v609
    %v658 = vmul.f32 %v634, %v610
    %v659 = vmul.f32 %v634, %v611
    %v660 = vmul.f32 %v638, %v612
    %v661 = vmul.f32 %v638, %v613
    %v662 = vmul.f32 %v642, %v614
    %v663 = vmul.f32 %v642, %v615
    %v664 = vmul.f32 %v646, %v616
    %v665 = vmul.f32 %v646, %v617
    %v666 = vmul.f32 %v650, %v618
    %v667 = vmul.f32 %v650, %v619
    %v668 = vadd.f32 %v652, %v654
    %v669 = vadd.f32 %v668, %v656
    %v670 = vadd.f32 %v669, %v658
    %v671 = vadd.f32 %v670, %v660
    %v672 = vadd.f32 %v671, %v662
    %v673 = vadd.f32 %v672, %v664
    %v674 = vadd.f32 %v673, %v666
    %v675 = vrot.slane %v674, 4
    %v676 = vadd.f32 %v674, %v675
    %v677 = vrot.slane %v676, 2
    %v678 = vadd.f32 %v676, %v677
    %v679 = vrot.slane %v678, 1
    %v680 = vadd.f32 %v678, %v679
    %v681 = vadd.f32 %v653, %v655
    %v682 = vadd.f32 %v681, %v657
    %v683 = vadd.f32 %v682, %v659
    %v684 = vadd.f32 %v683, %v661
    %v685 = vadd.f32 %v684, %v663
    %v686 = vadd.f32 %v685, %v665
    %v687 = vadd.f32 %v686, %v667
    %v688 = vrot.slane %v687, 4
    %v689 = vadd.f32 %v687, %v688
    %v690 = vrot.slane %v689, 2
    %v691 = vadd.f32 %v689, %v690
    %v692 = vrot.slane %v691, 1
    %v693 = vadd.f32 %v691, %v692
    %695 = vset.pattern.permute.xlu0 6
    %696 = vperm.xlu0 %695, %v26
    %v697 = vpop.permute.xlu0 %696
    %v699 = vadd.f32 %v680, %v697
    %v700 = vadd.f32 %v693, %v697
    %v703 = vcombine.low %v699, %v700
    %v705 = vunpack.c.l.s4 1966171168
    %v706 = vunpack.c.0.s8 %v705
    %v707 = vlaneseq
    %v708 = vshrl.u32 %v707, 7
    %v709 = vsub.s32 %v706, %v708
    %v710 = vrot.slane %v703, %v709
    %v712 = vunpack.c.l.s4 1966171168
    %v713 = vunpack.c.0.s8 %v712
    %v714 = vlaneseq
    %v715 = vshrl.u32 %v714, 7
    %v716 = vsub.s32 %v713, %v715
    %v717 = vrot.slane %v710, %v716
    %v719 = vlaneseq
    %vm720 = vcmp.ge.s32.totalorder %v719, 0
    %vm721 = vcmp.lt.s32.totalorder %v719, 256
    %vm722 = vmand %vm720, %vm721
    %723 = vst.msk [vmem:[#allocation2] sm:$0x3] %vm722, %v717
    // Predicated region
    $region14: #{mlp_forward.1} parent=1 // pred_check
      _
    $region15: #{mlp_forward.1} parent=1 // pred_check_branch
      %725 = sbr.rel (0) target = $region17
    $region16: #{mlp_forward.1} parent=1 // pred_region
      %s727 = ssub.s32 32, 32
      %728 = vsyncadd [#allocation3], %s727
      %s730 = sshll.u32 [#allocation2], 4
      %s731 = int_to_ptr.vmem [resolvable:$true] %s730
      %733 = dma.vmem_to_hbm [thread:$0]  %s731, 32, %s3, [#allocation3]
    $region17: #{mlp_forward.1} parent=1 // pred_fallthru
      _
    // Predicated region
    $region18: #{mlp_forward.1} parent=1 // pred_check
      _
    $region19: #{mlp_forward.1} parent=1 // pred_check_branch
      %735 = sbr.rel (0) target = $region21
    $region20: #{mlp_forward.1} parent=1 // pred_region
      %736 = dma.done [#allocation3], 32
    $region21: #{mlp_forward.1} parent=1 // pred_fallthru
      _
    %737 = vsyncpa [#allocation3], 1

</llo_original>
